<compile_context>
chip_gen: v5e
topology: v5e:2x2
jax: 0.10.0
libtpu: 0.0.40
codegen_flags: <defaults>
</compile_context>

<pallas_src>
from functools import partial

import jax
import jax.numpy as jnp
from jax.experimental import pallas as pl
from jax.experimental.pallas import tpu as pltpu


def _round_up(x, m):
    return (x + m - 1) // m * m


def _patch_embed_kernel(x_ref, w_ref, b_ref, o_ref):
    # x_ref: (tm, K)   patch tile              (compute dtype, e.g. bf16)
    # w_ref: (K, tn)   projection weight tile  (compute dtype)  -- resident
    # b_ref: (1, tn)   bias tile               (f32)            -- resident
    # o_ref: (tm, tn)  output tile             (out dtype)
    acc = jnp.dot(x_ref[...], w_ref[...], preferred_element_type=jnp.float32)
    o_ref[...] = (acc + b_ref[...]).astype(o_ref.dtype)


@partial(jax.jit, static_argnums=(3, 4, 5))
def patch_embed(x, weight, bias, patch_size,
                compute_dtype=jnp.bfloat16, out_dtype=None):
    """x: (B, C, H, W); weight: (E, C, P, P); bias: (E,) -> (B, n_patches, E)."""
    B, C, H, W = x.shape
    E = weight.shape[0]
    P = patch_size
    hp, wp = H // P, W // P
    n_patches = hp * wp
    K = C * P * P
    M = B * n_patches
    out_dtype = x.dtype if out_dtype is None else out_dtype

    cb = jnp.dtype(compute_dtype).itemsize
    ob = jnp.dtype(out_dtype).itemsize

    # --- glue: patch extraction (layout only, no FLOPs), fused with the cast ---
    # (B, C, hp, P, wp, P) -> (B, hp, wp, C, P, P) -> (M, K); flatten order
    # (c, ph, pw) matches weight.reshape(E, K).
    patches = x.reshape(B, C, hp, P, wp, P)
    patches = jnp.transpose(patches, (0, 2, 4, 1, 3, 5)).astype(compute_dtype)
    patches = patches.reshape(M, K)

    w2d = weight.reshape(E, K).T.astype(compute_dtype)   # (K, E)
    b2d = bias.astype(jnp.float32).reshape(1, E)          # (1, E)

    # --- E tiling: untiled (weight/bias resident, no E padding) up to 2048 ----
    E_UNTILED_MAX = 2048
    if E <= E_UNTILED_MAX:
        tn = E
        E_pad = E
    else:
        tn = 512
        E_pad = _round_up(E, tn)
        w2d = jnp.pad(w2d, ((0, 0), (0, E_pad - E)))
        b2d = jnp.pad(b2d, ((0, 0), (0, E_pad - E)))

    # --- M tiling: big tiles, >=2 tiles when there is enough work (megacore) --
    row_align = 16 if compute_dtype == jnp.bfloat16 else 8
    TM_MAX = 1024
    if M <= 512:
        tm = _round_up(M, row_align)                       # single tile
    else:
        tm = min(TM_MAX, _round_up((M + 1) // 2, row_align))  # >= 2 tiles

    # Double-buffered VMEM estimate (inputs + output) + f32 accumulator temp.
    def _vmem_bytes(tm_):
        return (2 * (tm_ * K * cb + K * tn * cb + tn * 4 + tm_ * tn * ob)
                + tm_ * tn * 4)

    while tm > row_align and _vmem_bytes(tm) > (20 << 20):
        tm = _round_up(max(tm // 2, row_align), row_align)

    M_pad = _round_up(M, tm)
    if M_pad != M:
        patches = jnp.pad(patches, ((0, M_pad - M), (0, 0)))

    cost = pl.CostEstimate(
        flops=2 * M * K * E,
        transcendentals=0,
        bytes_accessed=M * K * cb + K * E_pad * cb + E_pad * 4 + M * E_pad * ob,
    )
    # Explicit scoped-VMEM limit: clears v5e's 16 MiB default for large tiles,
    # stays well under v7x's 64 MiB physical VMEM.
    vmem_limit = int(min(48 << 20, max(32 << 20, 2 * _vmem_bytes(tm))))

    if E <= E_UNTILED_MAX:
        grid = (M_pad // tm,)
        in_specs = [
            pl.BlockSpec((tm, K), lambda i: (i, 0)),
            pl.BlockSpec((K, tn), lambda i: (0, 0)),   # resident: one DMA total
            pl.BlockSpec((1, tn), lambda i: (0, 0)),   # resident: one DMA total
        ]
        out_specs = pl.BlockSpec((tm, tn), lambda i: (i, 0))
        dim_sem = ("parallel",)
    else:
        # Fallback for huge E: E is the OUTER axis so the weight block only
        # changes once per E-tile (no per-M-step weight re-DMA).
        grid = (E_pad // tn, M_pad // tm)
        in_specs = [
            pl.BlockSpec((tm, K), lambda j, i: (i, 0)),
            pl.BlockSpec((K, tn), lambda j, i: (0, j)),
            pl.BlockSpec((1, tn), lambda j, i: (0, j)),
        ]
        out_specs = pl.BlockSpec((tm, tn), lambda j, i: (i, j))
        dim_sem = ("parallel", "parallel")

    out = pl.pallas_call(
        _patch_embed_kernel,
        out_shape=jax.ShapeDtypeStruct((M_pad, E_pad), out_dtype),
        grid_spec=pltpu.PrefetchScalarGridSpec(
            num_scalar_prefetch=0,
            grid=grid,
            in_specs=in_specs,
            out_specs=out_specs,
        ),
        compiler_params=pltpu.CompilerParams(
            dimension_semantics=dim_sem,
            vmem_limit_bytes=vmem_limit,
        ),
        cost_estimate=cost,
    )(patches, w2d, b2d)

    if M_pad != M:
        out = out[:M]          # contiguous row slice only (cheap)
    if E_pad != E:
        out = out[:, :E]       # only reachable for E > 2048 fallback
    return out.reshape(B, n_patches, E)


def patch_embed_reference(x, weight, bias, patch_size):
    """Pure-JAX reference: Conv2d(stride=kernel=P) + flatten(2) + transpose(1,2)."""
    out = jax.lax.conv_general_dilated(
        x, weight,
        window_strides=(patch_size, patch_size),
        padding="VALID",
        dimension_numbers=("NCHW", "OIHW", "NCHW"),
    ) + bias.reshape(1, -1, 1, 1)
    B, E, hp, wp = out.shape
    return jnp.transpose(out.reshape(B, E, hp * wp), (0, 2, 1))


if __name__ == "__main__":
    key = jax.random.PRNGKey(0)

    # --- check 1: tiny demo shape, f32 path, tight tolerance ------------------
    B, C, IMG, P, E = 2, 3, 16, 4, 32
    k1, k2, k3, key = jax.random.split(key, 4)
    x = jax.random.normal(k1, (B, C, IMG, IMG), dtype=jnp.float32)
    weight = 0.02 * jax.random.normal(k2, (E, C, P, P), dtype=jnp.float32)
    bias = 0.01 * jax.random.normal(k3, (E,), dtype=jnp.float32)

    y = jax.block_until_ready(patch_embed(x, weight, bias, P, jnp.float32))
    y_ref = patch_embed_reference(x, weight, bias, P)
    assert y.shape == (B, (IMG // P) ** 2, E), y.shape
    assert jnp.allclose(y, y_ref, atol=1e-5, rtol=1e-5), "f32 mismatch vs reference"

    # --- check 2: module-spec dims (C=3, img=32, P=4, E=192), bf16 compute ----
    # M = 13*64 = 832 -> two 416-row tiles (no M pad, no E pad, resident weight).
    B2, C2, IMG2, P2, E2 = 13, 3, 32, 4, 192
    k1, k2, k3, key = jax.random.split(key, 4)
    x2 = jax.random.normal(k1, (B2, C2, IMG2, IMG2), dtype=jnp.float32)
    w2 = 0.02 * jax.random.normal(k2, (E2, C2, P2, P2), dtype=jnp.float32)
    b2 = 0.01 * jax.random.normal(k3, (E2,), dtype=jnp.float32)

    y2 = jax.block_until_ready(patch_embed(x2, w2, b2, P2, jnp.bfloat16))
    y2_ref = patch_embed_reference(x2, w2, b2, P2)
    assert y2.shape == (B2, (IMG2 // P2) ** 2, E2), y2.shape
    assert jnp.allclose(y2, y2_ref, atol=1e-2, rtol=1e-2), "bf16 mismatch vs reference"

    # --- check 3: bf16 output path (halves dominant output HBM stream) --------
    y3 = jax.block_until_ready(
        patch_embed(x2, w2, b2, P2, jnp.bfloat16, jnp.bfloat16))
    assert y3.dtype == jnp.bfloat16
    assert jnp.allclose(y3.astype(jnp.float32), y2_ref, atol=2e-2, rtol=2e-2), \
        "bf16-out mismatch vs reference"

    print("KERNEL_OK")
</pallas_src>

<mosaic_0001>
module attributes {stable_mosaic.version = 11 : i64} {
  func.func @_patch_embed_kernel(%arg0: i32, %arg1: memref<32x48xf32, #tpu.memory_space<vmem>>, %arg2: memref<48x32xf32, #tpu.memory_space<vmem>>, %arg3: memref<1x32xf32, #tpu.memory_space<vmem>>, %arg4: memref<32x32xf32, #tpu.memory_space<vmem>>) attributes {dimension_semantics = [#tpu.dimension_semantics<parallel>], iteration_bounds = array<i64: 1>, scalar_prefetch = 0 : i64, scratch_operands = 0 : i64, tpu.core_type = #tpu.core_type<tc>, window_params = [{transform_indices = @transform_0, window_bounds = array<i64: 32, 48>}, {pipeline_mode = #tpu.pipeline_mode<synchronous>, transform_indices = @transform_1, window_bounds = array<i64: 48, 32>}, {pipeline_mode = #tpu.pipeline_mode<synchronous>, transform_indices = @transform_2, window_bounds = array<i64: 1, 32>}, {transform_indices = @transform_3, window_bounds = array<i64: 32, 32>}]} {
    %c0 = arith.constant 0 : index
    %c0_0 = arith.constant 0 : index
    %0 = vector.load %arg1[%c0, %c0_0] : memref<32x48xf32, #tpu.memory_space<vmem>>, vector<32x48xf32>
    %c0_1 = arith.constant 0 : index
    %c0_2 = arith.constant 0 : index
    %1 = vector.load %arg2[%c0_1, %c0_2] : memref<48x32xf32, #tpu.memory_space<vmem>>, vector<48x32xf32>
    %cst = arith.constant dense<0.000000e+00> : vector<32x32xf32>
    %2 = tpu.matmul %0, %1, %cst {dimension_numbers = #tpu.dot_dimension_numbers<[1], [0], [0], [1], [0, 0, 1, 1], [], []>} : vector<32x48xf32>, vector<48x32xf32>, vector<32x32xf32> -> vector<32x32xf32>
    %c0_3 = arith.constant 0 : index
    %c0_4 = arith.constant 0 : index
    %3 = vector.load %arg3[%c0_3, %c0_4] : memref<1x32xf32, #tpu.memory_space<vmem>>, vector<1x32xf32>
    %4 = vector.broadcast %3 : vector<1x32xf32> to vector<32x32xf32>
    %5 = arith.addf %2, %4 : vector<32x32xf32>
    %c0_5 = arith.constant 0 : index
    %c0_6 = arith.constant 0 : index
    %6 = vector.load %arg4[%c0_5, %c0_6] : memref<32x32xf32, #tpu.memory_space<vmem>>, vector<32x32xf32>
    tpu.vector_store %arg4[%c0_5, %c0_6], %5 {strides = array<i32>} : memref<32x32xf32, #tpu.memory_space<vmem>>, vector<32x32xf32>,
    return
  }
  func.func @transform_0(%arg0: i32) -> (i32, i32) {
    %c0_i32 = arith.constant 0 : i32
    %c0_i32_0 = arith.constant 0 : i32
    return %arg0, %c0_i32 : i32, i32
  }
  func.func @transform_1(%arg0: i32) -> (i32, i32) {
    %c0_i32 = arith.constant 0 : i32
    %c0_i32_0 = arith.constant 0 : i32
    %c0_i32_1 = arith.constant 0 : i32
    return %c0_i32, %c0_i32_0 : i32, i32
  }
  func.func @transform_2(%arg0: i32) -> (i32, i32) {
    %c0_i32 = arith.constant 0 : i32
    %c0_i32_0 = arith.constant 0 : i32
    %c0_i32_1 = arith.constant 0 : i32
    return %c0_i32, %c0_i32_0 : i32, i32
  }
  func.func @transform_3(%arg0: i32) -> (i32, i32) {
    %c0_i32 = arith.constant 0 : i32
    %c0_i32_0 = arith.constant 0 : i32
    return %arg0, %c0_i32 : i32, i32
  }
}

</mosaic_0001>

<llo_original>
// kernel: patch_embed.1
$region0: #{patch_embed.1}
  #allocation0 [shape = 'u32[]', space=smem, size = 0x4, offset = 0x4, fixed_abs, tag = 'smem constant byte address 0x4 - core index']
  #allocation1 [shape = 'u32[72,128]{1,0:T(1,128)}', space=vmem, size = 0x9000, scoped, tag = 'internal scratch']
  %s0 = inlined_call_operand.vmem [shape: f32[32,48], index: 0, kind: input, shape index: {}]
  %s1 = inlined_call_operand.vmem [shape: f32[48,32], index: 1, kind: input, shape index: {}]
  %s2 = inlined_call_operand.vmem [shape: f32[1,32], index: 2, kind: input, shape index: {}]
  %s3 = inlined_call_operand.hbm [shape: f32[32,32], index: 3, kind: output, shape index: {}]
  %s4 = sld [smem:[#allocation0]]
  $region22: #{patch_embed.1} parent=0
    _
  %s6 = ssub.s32 1, %s4
  %s7 = scalar_select 0, %s6, %s4
  $region1: #{patch_embed.1} parent=0
    #allocation2 [shape = 'u8[16384]{0}', space=vmem, size = 0x4000, scoped, tag = 'output window, operand 0, single buffered']
    #allocation3 [shape = 's32[1]{0}', space=sflag, size = 0x4, scoped, tag = 'scoped memory for patch_embed.1']
    %8 = vsyncpa [#allocation3], 0
    // Predicated region
    $region2: #{patch_embed.1} parent=1 // pred_check
      _
    $region3: #{patch_embed.1} parent=1 // pred_check_branch
      %10 = sbr.rel (0) target = $region5
    $region4: #{patch_embed.1} parent=1 // pred_region
      _
    $region5: #{patch_embed.1} parent=1 // pred_fallthru
      _
    // Predicated region
    $region6: #{patch_embed.1} parent=1 // pred_check
      _
    $region7: #{patch_embed.1} parent=1 // pred_check_branch
      %12 = sbr.rel (0) target = $region9
    $region8: #{patch_embed.1} parent=1 // pred_region
      _
    $region9: #{patch_embed.1} parent=1 // pred_fallthru
      _
    // Predicated region
    $region10: #{patch_embed.1} parent=1 // pred_check
      _
    $region11: #{patch_embed.1} parent=1 // pred_check_branch
      %14 = sbr.rel (0) target = $region13
    $region12: #{patch_embed.1} parent=1 // pred_region
      _
    $region13: #{patch_embed.1} parent=1 // pred_fallthru
      _
    %v15 = vld [vmem:[%s0] sm:$0xff]
    %v16 = vld [vmem:[%s0 + $0x8] sm:$0xff]
    %v17 = vld [vmem:[%s0 + $0x10] sm:$0xff]
    %v18 = vld [vmem:[%s0 + $0x18] sm:$0xff]
    %v19 = vld [vmem:[%s1] sm:$0xff]
    %v20 = vld [vmem:[%s1 + $0x8] sm:$0xff]
    %v21 = vld [vmem:[%s1 + $0x10] sm:$0xff]
    %v22 = vld [vmem:[%s1 + $0x18] sm:$0xff]
    %v23 = vld [vmem:[%s1 + $0x20] sm:$0xff]
    %v24 = vld [vmem:[%s1 + $0x28] sm:$0xff]
    %v25 = vld [vmem:[%s2] sm:$0x1]
    %v27 = vperm.slane %v25, 0
    %vm29 = vcmask 392192
    %v31 = vsel %vm29, %v15, 0
    %v34 = vsel %vm29, %v16, 0
    %v37 = vsel %vm29, %v17, 0
    %v40 = vsel %vm29, %v18, 0
    %42 = vmatpush.msra.mxu0 0.0
    %43 = vmatpush.msra.mxu0 0.0
    %44 = vmatpush.msra.mxu0 0.0
    %45 = vmatpush.msra.mxu0 0.0
    %46 = vmatpush.msra.mxu0 0.0
    %47 = vmatpush.msra.mxu0 0.0
    %48 = vmatpush.msra.mxu0 0.0
    %49 = vmatpush.msra.mxu0 0.0
    %50 = vmatpush.msra.mxu0 0.0
    %51 = vmatpush.msra.mxu0 0.0
    %52 = vmatpush.msra.mxu0 %v24
    %53 = vmatpush.msra.mxu0 %v23
    %54 = vmatpush.msra.mxu0 %v22
    %55 = vmatpush.msra.mxu0 %v21
    %56 = vmatpush.msra.mxu0 %v20
    %57 = vmatpush.msra.mxu0 %v19
    %58 = vmatmul.f32.gmra.mxu0 %v31
    %v59 = vpop.f32.mrf.mxu0
    %v60 = vadd.f32 %v27, %v59
    %61 = vmatmul.f32.gmra.mxu0 %v34
    %v62 = vpop.f32.mrf.mxu0
    %v63 = vadd.f32 %v27, %v62
    %64 = vmatmul.f32.gmra.mxu0 %v37
    %v65 = vpop.f32.mrf.mxu0
    %v66 = vadd.f32 %v27, %v65
    %67 = vmatmul.f32.gmra.mxu0 %v40
    %v68 = vpop.f32.mrf.mxu0
    %v69 = vadd.f32 %v27, %v68
    %70 = vdwg.mxu0
    %vm71 = vcmask 261120
    %72 = vst.msk [vmem:[#allocation2] sm:$0xff] %vm71, %v60
    %73 = vst.msk [vmem:[#allocation2 + $0x8] sm:$0xff] %vm71, %v63
    %74 = vst.msk [vmem:[#allocation2 + $0x10] sm:$0xff] %vm71, %v66
    %75 = vst.msk [vmem:[#allocation2 + $0x18] sm:$0xff] %vm71, %v69
    // Predicated region
    $region14: #{patch_embed.1} parent=1 // pred_check
      _
    $region15: #{patch_embed.1} parent=1 // pred_check_branch
      %77 = sbr.rel (0) target = $region17
    $region16: #{patch_embed.1} parent=1 // pred_region
      %79 = vsyncadd [#allocation3], 0
      %s80 = sshll.u32 [#allocation2], 4
      %s81 = int_to_ptr.vmem [resolvable:$true] %s80
      %s82 = sshll.u32 %s3, 4
      %s83 = int_to_ptr.hbm [resolvable:$true] %s82
      %88 = dma.vmem_to_hbm [thread:$0]  %s81, 512, %s83, [#allocation3], 128, 128, 8
    $region17: #{patch_embed.1} parent=1 // pred_fallthru
      _
    // Predicated region
    $region18: #{patch_embed.1} parent=1 // pred_check
      _
    $region19: #{patch_embed.1} parent=1 // pred_check_branch
      %90 = sbr.rel (0) target = $region21
    $region20: #{patch_embed.1} parent=1 // pred_region
      %92 = dma.done [#allocation3], 512
    $region21: #{patch_embed.1} parent=1 // pred_fallthru
      _
    %93 = vsyncpa [#allocation3], 1

</llo_original>
